<compile_context>
chip_gen: v6e
topology: v6e:2x2x1
jax: 0.10.0
libtpu: 0.0.40
codegen_flags: <defaults>
</compile_context>

<pallas_src>
import functools

import jax
import jax.numpy as jnp
from jax.experimental import pallas as pl
from jax.experimental.pallas import tpu as pltpu

LANE = 128        # vreg lane width (last dim)
SUBLANE = 8       # f32 sublane count (second-to-last dim)
BLK_ROWS = 4096   # rows per grid block -> 512K arms, 2 MiB per f32 buffer


def _padded_rows(n_arms: int) -> int:
    """Rows of the (rows, 128) state layout.

    Small/medium sizes pad to a multiple of 16 rows so the grid can always be
    split into 2 blocks whose row count is a multiple of 8 (both v7x
    TensorCores participate via the "parallel" axis).  Large sizes pad to a
    multiple of BLK_ROWS so BLK_ROWS-sized blocks tile the state exactly.
    """
    rows = -(-n_arms // LANE)
    if rows <= 2 * BLK_ROWS:
        rows = -(-rows // (2 * SUBLANE)) * (2 * SUBLANE)
    else:
        rows = -(-rows // BLK_ROWS) * BLK_ROWS
    return rows


def _block_rows(rows: int) -> int:
    """Rows per grid block: >= 2 grid steps whenever possible, capped at BLK_ROWS."""
    if rows > 2 * BLK_ROWS:
        return BLK_ROWS
    return max(SUBLANE, rows // 2)


def _ucb_kernel(total_ref, n_ref, r_ref, out_ref):
    # total_ref: SMEM (1, 1) f32      -- total_n_obs_all_arms
    # n_ref:     VMEM (blk, 128) f32  -- per-arm observation counts (0 in pad)
    # r_ref:     VMEM (blk, 128) f32  -- per-arm reward sums        (0 in pad)
    # out_ref:   VMEM (blk, 128) f32  -- per-arm UCB scores
    n = n_ref[...]
    r = r_ref[...]
    total = total_ref[0, 0]

    observed = n > 0.0
    safe_n = jnp.where(observed, n, 1.0)        # avoid 0/0 before final select
    # log(total) as a broadcast vector op: guaranteed EUP lowering and free
    # filler slots in this HBM-bound kernel (no wrapper-side dispatch needed).
    log_total = jnp.log(jnp.full_like(n, total))
    avg_reward = r / safe_n                     # exact divide
    explore = jnp.sqrt(2.0 * log_total / safe_n)  # exact sqrt
    out_ref[...] = jnp.where(observed, avg_reward + explore, jnp.inf)


@functools.partial(jax.jit, static_argnames=("n_arms",))
def _ucb_forward(n2d, r2d, total_n_obs_all_arms, *, n_arms: int):
    """UCB1 scores over padded (rows, 128) state; returns (n_arms,) scores."""
    rows = n2d.shape[0]
    blk = _block_rows(rows)
    grid = (rows // blk,)
    total = jnp.asarray(total_n_obs_all_arms, jnp.float32).reshape(1, 1)

    out2d = pl.pallas_call(
        _ucb_kernel,
        out_shape=jax.ShapeDtypeStruct((rows, LANE), jnp.float32),
        grid=grid,
        in_specs=[
            pl.BlockSpec(memory_space=pltpu.MemorySpace.SMEM),   # total scalar
            pl.BlockSpec((blk, LANE), lambda i: (i, 0)),         # n per arm
            pl.BlockSpec((blk, LANE), lambda i: (i, 0)),         # reward sums
        ],
        out_specs=pl.BlockSpec((blk, LANE), lambda i: (i, 0)),
        compiler_params=pltpu.CompilerParams(
            dimension_semantics=("parallel",)),
    )(total, n2d, r2d)
    return out2d.reshape(-1)[:n_arms]


class BaseUCBState:
    """JAX mirror of BaseUCB's buffers, stored in the kernel's padded layout."""

    def __init__(self, n_arms: int):
        self.n_arms = n_arms
        self.arm_ids = list(range(n_arms))
        self._rows = _padded_rows(n_arms)
        shape = (self._rows, LANE)
        self.total_n_obs_per_arm = jnp.zeros(shape, jnp.float32)
        self.total_sum_reward_per_arm = jnp.zeros(shape, jnp.float32)
        # Kept as a device scalar -> no host sync on update.
        self.total_n_obs_all_arms = jnp.zeros((), jnp.float32)

    def _to_padded(self, v):
        v = jnp.asarray(v, jnp.float32).reshape(-1)
        pad = self._rows * LANE - self.n_arms
        return jnp.pad(v, (0, pad)).reshape(self._rows, LANE)

    def add_batch_observations(self, n_obs_per_arm, sum_reward_per_arm):
        n2d = self._to_padded(n_obs_per_arm)
        r2d = self._to_padded(sum_reward_per_arm)
        self.total_n_obs_per_arm = self.total_n_obs_per_arm + n2d
        self.total_sum_reward_per_arm = self.total_sum_reward_per_arm + r2d
        self.total_n_obs_all_arms = self.total_n_obs_all_arms + jnp.sum(n2d)

    def forward(self):
        # forward() == get_ucb_scores() (UCB1 concrete formula), in Pallas,
        # with the whole path compiled into a single jitted executable.
        # NOTE: total < 1 gives NaN/-inf scores, matching the reference
        # formula's domain (log of the total observation count).
        return _ucb_forward(self.total_n_obs_per_arm,
                            self.total_sum_reward_per_arm,
                            self.total_n_obs_all_arms,
                            n_arms=self.n_arms)


def _reference_scores(n, r, total):
    return jnp.where(n > 0,
                     r / n + jnp.sqrt(2.0 * jnp.log(total) / n),
                     jnp.inf)


if __name__ == "__main__":
    # TODO(synk): BaseUCB.get_ucb_scores is abstract; the UCB1 concrete formula
    # from the same file is what the kernel implements.
    key = jax.random.PRNGKey(0)

    for n_arms, unseen_arm in ((16, 3), (200, 17)):
        key, k1, k2 = jax.random.split(key, 3)
        n_obs = jax.random.randint(k1, (n_arms,), 1, 20).astype(jnp.float32)
        n_obs = n_obs.at[unseen_arm].set(0.0)   # exercise the +inf branch
        rewards = jax.random.uniform(k2, (n_arms,), jnp.float32) * n_obs

        bandit = BaseUCBState(n_arms)
        bandit.add_batch_observations(n_obs, rewards)
        scores = jax.block_until_ready(bandit.forward())

        ref = _reference_scores(n_obs, rewards, bandit.total_n_obs_all_arms)
        observed = n_obs > 0
        assert scores.shape == (n_arms,)
        assert bool(jnp.all(jnp.isinf(scores[~observed]))), \
            "unobserved arms must score +inf"
        # Exact divide/sqrt in-kernel -> tight tolerance vs the reference.
        assert bool(jnp.allclose(scores[observed], ref[observed],
                                 rtol=1e-5, atol=1e-5)), \
            f"kernel mismatch vs reference (n_arms={n_arms})"

    print("KERNEL_OK")
</pallas_src>

<mosaic_0001>
module attributes {stable_mosaic.version = 11 : i64} {
  func.func @_ucb_kernel(%arg0: i32, %arg1: memref<1x1xf32, #tpu.memory_space<smem>>, %arg2: memref<8x128xf32, #tpu.memory_space<vmem>>, %arg3: memref<8x128xf32, #tpu.memory_space<vmem>>, %arg4: memref<8x128xf32, #tpu.memory_space<vmem>>) attributes {dimension_semantics = [#tpu.dimension_semantics<parallel>], iteration_bounds = array<i64: 2>, scalar_prefetch = 0 : i64, scratch_operands = 0 : i64, tpu.core_type = #tpu.core_type<tc>, window_params = [{transform_indices = @transform_0, window_bounds = array<i64: 1, 1>}, {transform_indices = @transform_1, window_bounds = array<i64: 8, 128>}, {transform_indices = @transform_2, window_bounds = array<i64: 8, 128>}, {transform_indices = @transform_3, window_bounds = array<i64: 8, 128>}]} {
    %c0 = arith.constant 0 : index
    %c0_0 = arith.constant 0 : index
    %0 = vector.load %arg2[%c0, %c0_0] : memref<8x128xf32, #tpu.memory_space<vmem>>, vector<8x128xf32>
    %c0_1 = arith.constant 0 : index
    %c0_2 = arith.constant 0 : index
    %1 = vector.load %arg3[%c0_1, %c0_2] : memref<8x128xf32, #tpu.memory_space<vmem>>, vector<8x128xf32>
    %c0_3 = arith.constant 0 : index
    %c0_4 = arith.constant 0 : index
    %2 = memref.load %arg1[%c0_3, %c0_4] : memref<1x1xf32, #tpu.memory_space<smem>>
    %cst = arith.constant 0.000000e+00 : f32
    %3 = vector.broadcast %cst : f32 to vector<8x128xf32>
    %4 = arith.cmpf ogt, %0, %3 : vector<8x128xf32>
    %cst_5 = arith.constant 1.000000e+00 : f32
    %5 = vector.broadcast %cst_5 : f32 to vector<8x128xf32>
    %6 = arith.select %4, %0, %5 : vector<8x128xi1>, vector<8x128xf32>
    %7 = vector.broadcast %2 : f32 to vector<8x128xf32>
    %8 = math.log %7 : vector<8x128xf32>
    %9 = arith.divf %1, %6 : vector<8x128xf32>
    %cst_6 = arith.constant 2.000000e+00 : f32
    %10 = vector.broadcast %cst_6 : f32 to vector<8x128xf32>
    %11 = arith.mulf %10, %8 : vector<8x128xf32>
    %12 = arith.divf %11, %6 : vector<8x128xf32>
    %13 = math.sqrt %12 : vector<8x128xf32>
    %14 = arith.addf %9, %13 : vector<8x128xf32>
    %cst_7 = arith.constant 0x7F800000 : f32
    %15 = vector.broadcast %cst_7 : f32 to vector<8x128xf32>
    %16 = arith.select %4, %14, %15 : vector<8x128xi1>, vector<8x128xf32>
    %c0_8 = arith.constant 0 : index
    %c0_9 = arith.constant 0 : index
    %17 = vector.load %arg4[%c0_8, %c0_9] : memref<8x128xf32, #tpu.memory_space<vmem>>, vector<8x128xf32>
    tpu.vector_store %arg4[%c0_8, %c0_9], %16 {strides = array<i32>} : memref<8x128xf32, #tpu.memory_space<vmem>>, vector<8x128xf32>,
    return
  }
  func.func @transform_0(%arg0: i32) -> (i32, i32) {
    %c0_i32 = arith.constant 0 : i32
    %c0_i32_0 = arith.constant 0 : i32
    %c0_i32_1 = arith.constant 0 : i32
    return %c0_i32, %c0_i32_0 : i32, i32
  }
  func.func @transform_1(%arg0: i32) -> (i32, i32) {
    %c0_i32 = arith.constant 0 : i32
    %c0_i32_0 = arith.constant 0 : i32
    return %arg0, %c0_i32 : i32, i32
  }
  func.func @transform_2(%arg0: i32) -> (i32, i32) {
    %c0_i32 = arith.constant 0 : i32
    %c0_i32_0 = arith.constant 0 : i32
    return %arg0, %c0_i32 : i32, i32
  }
  func.func @transform_3(%arg0: i32) -> (i32, i32) {
    %c0_i32 = arith.constant 0 : i32
    %c0_i32_0 = arith.constant 0 : i32
    return %arg0, %c0_i32 : i32, i32
  }
}

</mosaic_0001>

<llo_original>
// kernel: _ucb_forward.1
$region0: #{_ucb_forward.1}
  #allocation0 [shape = 'u32[]', space=smem, size = 0x4, offset = 0x4, fixed_abs, tag = 'smem constant byte address 0x4 - core index']
  #allocation1 [shape = 'u32[144,128]{1,0:T(1,128)}', space=vmem, size = 0x12000, scoped, tag = 'internal scratch']
  #allocation2 [shape = 'f32[1,1]{1,0:T(1,128)S(6)}', space=smem, size = 0x200, scoped, tag = 'scoped memory for _ucb_forward.1']
  %s0 = inlined_call_operand.<no memory space> [shape: f32[1,1], index: 0, kind: input, shape index: {}]
  %s1 = inlined_call_operand.hbm [shape: f32[16,128], index: 1, kind: input, shape index: {}]
  %s2 = inlined_call_operand.hbm [shape: f32[16,128], index: 2, kind: input, shape index: {}]
  %s3 = inlined_call_operand.vmem [shape: f32[16,128], index: 3, kind: output, shape index: {}]
  %s4 = sld [smem:[#allocation0]]
  $region53: #{_ucb_forward.1} parent=0
    _
  %s6 = ssub.s32 1, %s4
  %s7 = scalar_select 0, %s6, %s4
  %8 = sst [smem:[#allocation2]] %s0
  $region1: #{_ucb_forward.1} parent=0
    #allocation3 [shape = 'u8[8192]{0}', space=vmem, size = 0x2000, scoped, tag = 'input window, operand 1']
    #allocation4 [shape = 's32[2]{0}', space=sflag, size = 0x8, scoped, tag = 'scoped memory for _ucb_forward.1']
    #allocation5 [shape = 'u8[8192]{0}', space=vmem, size = 0x2000, scoped, tag = 'input window, operand 2']
    #allocation6 [shape = 's32[2]{0}', space=sflag, size = 0x8, scoped, tag = 'scoped memory for _ucb_forward.1']
    %9 = vsyncpa [#allocation4], 0
    %s10 = scalar_lea.sflag [#allocation4], 1
    %11 = vsyncpa %s10, 0
    %12 = vsyncpa [#allocation6], 0
    %s13 = scalar_lea.sflag [#allocation6], 1
    %14 = vsyncpa %s13, 0
    loop: start=0, step=1, limit=4
    $region2: #{_ucb_forward.1} parent=1 // loop_pre_header
      _
    $region3: #{_ucb_forward.1} parent=1 // loop_header
      %s16 = sphi 0, %s20
      %p17 = scmp.ge.s32.totalorder %s16, 4
      %s24 = sphi 0, %s24
      %s26 = sphi 0, %s24
      %s27 = sphi 0, %s26
      %s41 = sphi 0, %s27
      %s47 = sphi 0, %s49
      %s50 = sphi 0, %s47
      %s51 = sphi 0, %s50
      %s67 = sphi 0, %s51
      %s73 = sphi 0, %s75
      %s76 = sphi 0, %s73
      %s77 = sphi 0, %s76
      %s93 = sphi 0, %s77
      %s99 = sphi 0, %s101
      %s102 = sphi 0, %s99
      %s103 = sphi 0, %s102
      %s119 = sphi 0, %s103
    $region4: #{_ucb_forward.1} parent=1 // loop_header_branch
      %19 = sbr.rel (%p17) target = $region8
    $region5: #{_ucb_forward.1} parent=1 // loop_body
      %s21 = ssub.s32 %s16, 1
      %s22 = ssub.s32 %s16, 2
      %s23 = sadd.s32 %s16, 1
      %s25 = sadd.s32 %s24, 1
      %p28 = scmp.eq.s32.totalorder %s16, 1
      %p29 = scmp.ne.s32.totalorder %s24, %s26
      %p30 = scmp.eq.s32.totalorder %s16, 0
      %p31 = por %p29, %p30
      %p32 = scmp.ne.s32.totalorder %s24, %s26
      %p33 = scmp.eq.s32.totalorder %s21, 1
      %p34 = por %p32, %p33
      %p35 = scmp.ne.s32.totalorder %s26, %s27
      %p36 = scmp.eq.s32.totalorder %s21, 0
      %p37 = por %p35, %p36
      %p38 = scmp.ne.s32.totalorder %s26, %s27
      %p39 = scmp.eq.s32.totalorder %s22, 1
      %p40 = por %p38, %p39
      %p42 = scmp.ne.s32.totalorder %s27, %s41
      %p43 = scmp.eq.s32.totalorder %s22, 0
      %p44 = por %p42, %p43
      %s45 = ssub.s32 %s16, %s23
      %p46 = scmp.eq.s32.totalorder %s45, 0
      %s48 = sadd.s32 %s47, 1
      %s49 = scalar_select %p46, %s47, %s48
      %p52 = pneg %p46
      %p53 = scmp.eq.s32.totalorder %s16, 1
      %p54 = por %p52, %p53
      %p55 = scmp.ne.s32.totalorder %s47, %s50
      %p56 = scmp.eq.s32.totalorder %s16, 0
      %p57 = por %p55, %p56
      %p58 = scmp.ne.s32.totalorder %s47, %s50
      %p59 = scmp.eq.s32.totalorder %s21, 1
      %p60 = por %p58, %p59
      %p61 = scmp.ne.s32.totalorder %s50, %s51
      %p62 = scmp.eq.s32.totalorder %s21, 0
      %p63 = por %p61, %p62
      %p64 = scmp.ne.s32.totalorder %s50, %s51
      %p65 = scmp.eq.s32.totalorder %s22, 1
      %p66 = por %p64, %p65
      %p68 = scmp.ne.s32.totalorder %s51, %s67
      %p69 = scmp.eq.s32.totalorder %s22, 0
      %p70 = por %p68, %p69
      %s71 = ssub.s32 %s16, %s23
      %p72 = scmp.eq.s32.totalorder %s71, 0
      %s74 = sadd.s32 %s73, 1
      %s75 = scalar_select %p72, %s73, %s74
      %p78 = pneg %p72
      %p79 = scmp.eq.s32.totalorder %s16, 1
      %p80 = por %p78, %p79
      %p81 = scmp.ne.s32.totalorder %s73, %s76
      %p82 = scmp.eq.s32.totalorder %s16, 0
      %p83 = por %p81, %p82
      %p84 = scmp.ne.s32.totalorder %s73, %s76
      %p85 = scmp.eq.s32.totalorder %s21, 1
      %p86 = por %p84, %p85
      %p87 = scmp.ne.s32.totalorder %s76, %s77
      %p88 = scmp.eq.s32.totalorder %s21, 0
      %p89 = por %p87, %p88
      %p90 = scmp.ne.s32.totalorder %s76, %s77
      %p91 = scmp.eq.s32.totalorder %s22, 1
      %p92 = por %p90, %p91
      %p94 = scmp.ne.s32.totalorder %s77, %s93
      %p95 = scmp.eq.s32.totalorder %s22, 0
      %p96 = por %p94, %p95
      %s97 = ssub.s32 %s16, %s23
      %p98 = scmp.eq.s32.totalorder %s97, 0
      %s100 = sadd.s32 %s99, 1
      %s101 = scalar_select %p98, %s99, %s100
      %p104 = pneg %p98
      %p105 = scmp.eq.s32.totalorder %s16, 1
      %p106 = por %p104, %p105
      %p107 = scmp.ne.s32.totalorder %s99, %s102
      %p108 = scmp.eq.s32.totalorder %s16, 0
      %p109 = por %p107, %p108
      %p110 = scmp.ne.s32.totalorder %s99, %s102
      %p111 = scmp.eq.s32.totalorder %s21, 1
      %p112 = por %p110, %p111
      %p113 = scmp.ne.s32.totalorder %s102, %s103
      %p114 = scmp.eq.s32.totalorder %s21, 0
      %p115 = por %p113, %p114
      %p116 = scmp.ne.s32.totalorder %s102, %s103
      %p117 = scmp.eq.s32.totalorder %s22, 1
      %p118 = por %p116, %p117
      %p120 = scmp.ne.s32.totalorder %s103, %s119
      %p121 = scmp.eq.s32.totalorder %s22, 0
      %p122 = por %p120, %p121
      %p123 = scmp.le.s32.totalorder 1, %s16
      %p124 = scmp.lt.s32.totalorder %s16, 3
      %p125 = pnand %p123, %p124
      %p126 = pneg %p125
      // Predicated region
      $region9: #{_ucb_forward.1} parent=5 // pred_check
        _
      $region10: #{_ucb_forward.1} parent=5 // pred_check_branch
        %128 = sbr.rel (%p125) target = $region12
      $region11: #{_ucb_forward.1} parent=5 // pred_region
        %s129 = ssub.s32 %s16, 1
        // Predicated region
        $region13: #{_ucb_forward.1} parent=11 // pred_check
          %p130 = pneg %p37
        $region14: #{_ucb_forward.1} parent=11 // pred_check_branch
          %132 = sbr.rel (%p130) target = $region16
        $region15: #{_ucb_forward.1} parent=11 // pred_region
          _
        $region16: #{_ucb_forward.1} parent=11 // pred_fallthru
          _
      $region12: #{_ucb_forward.1} parent=5 // pred_fallthru
        _
      %p133 = scmp.lt.s32.totalorder %s16, 2
      // Predicated region
      $region17: #{_ucb_forward.1} parent=5 // pred_check
        %p134 = pneg %p133
      $region18: #{_ucb_forward.1} parent=5 // pred_check_branch
        %136 = sbr.rel (%p134) target = $region20
      $region19: #{_ucb_forward.1} parent=5 // pred_region
        // Predicated region
        $region21: #{_ucb_forward.1} parent=19 // pred_check
          %p137 = pneg %p57
        $region22: #{_ucb_forward.1} parent=19 // pred_check_branch
          %139 = sbr.rel (%p137) target = $region24
        $region23: #{_ucb_forward.1} parent=19 // pred_region
          %s140 = sand.u32 %s47, 1
          %s141 = scalar_lea.sflag [#allocation4], %s140
          %s142 = sand.u32 %s47, 1
          %s143 = smul.addr %s142, 8
          %s144 = scalar_lea.vmem [#allocation3], %s143
          %s146 = ssub.s32 128, 128
          %147 = vsyncadd %s141, %s146
          %s148 = smul.addr %s16, 128
          %s149 = scalar_lea.hbm %s1, %s148
          %s151 = sshll.u32 %s144, 4
          %s152 = int_to_ptr.vmem [resolvable:$true] %s151
          %154 = dma.hbm_to_vmem [thread:$0]  %s149, 128, %s152, %s141
        $region24: #{_ucb_forward.1} parent=19 // pred_fallthru
          _
        // Predicated region
        $region25: #{_ucb_forward.1} parent=19 // pred_check
          %p155 = pneg %p83
        $region26: #{_ucb_forward.1} parent=19 // pred_check_branch
          %157 = sbr.rel (%p155) target = $region28
        $region27: #{_ucb_forward.1} parent=19 // pred_region
          %s158 = sand.u32 %s73, 1
          %s159 = scalar_lea.sflag [#allocation6], %s158
          %s160 = sand.u32 %s73, 1
          %s161 = smul.addr %s160, 8
          %s162 = scalar_lea.vmem [#allocation5], %s161
          %s164 = ssub.s32 128, 128
          %165 = vsyncadd %s159, %s164
          %s166 = smul.addr %s16, 128
          %s167 = scalar_lea.hbm %s2, %s166
          %s169 = sshll.u32 %s162, 4
          %s170 = int_to_ptr.vmem [resolvable:$true] %s169
          %172 = dma.hbm_to_vmem [thread:$0]  %s167, 128, %s170, %s159
        $region28: #{_ucb_forward.1} parent=19 // pred_fallthru
          _
      $region20: #{_ucb_forward.1} parent=5 // pred_fallthru
        _
      %p173 = scmp.le.s32.totalorder 1, %s16
      %p174 = scmp.lt.s32.totalorder %s16, 3
      %p175 = pnand %p173, %p174
      %p176 = pneg %p175
      // Predicated region
      $region29: #{_ucb_forward.1} parent=5 // pred_check
        _
      $region30: #{_ucb_forward.1} parent=5 // pred_check_branch
        %178 = sbr.rel (%p175) target = $region32
      $region31: #{_ucb_forward.1} parent=5 // pred_region
        %s179 = ssub.s32 %s16, 1
        %s180 = sand.u32 %s50, 1
        %s181 = scalar_lea.sflag [#allocation4], %s180
        %s182 = sand.u32 %s50, 1
        %s183 = smul.addr %s182, 8
        %s184 = scalar_lea.vmem [#allocation3], %s183
        // Predicated region
        $region33: #{_ucb_forward.1} parent=31 // pred_check
          %p185 = pneg %p63
        $region34: #{_ucb_forward.1} parent=31 // pred_check_branch
          %187 = sbr.rel (%p185) target = $region36
        $region35: #{_ucb_forward.1} parent=31 // pred_region
          %188 = dma.done %s181, 128
        $region36: #{_ucb_forward.1} parent=31 // pred_fallthru
          _
        %s189 = sand.u32 %s76, 1
        %s190 = scalar_lea.sflag [#allocation6], %s189
        %s191 = sand.u32 %s76, 1
        %s192 = smul.addr %s191, 8
        %s193 = scalar_lea.vmem [#allocation5], %s192
        // Predicated region
        $region37: #{_ucb_forward.1} parent=31 // pred_check
          %p194 = pneg %p89
        $region38: #{_ucb_forward.1} parent=31 // pred_check_branch
          %196 = sbr.rel (%p194) target = $region40
        $region39: #{_ucb_forward.1} parent=31 // pred_region
          %197 = dma.done %s190, 128
        $region40: #{_ucb_forward.1} parent=31 // pred_fallthru
          _
        %p198 = pneg %p37
        %p199 = pneg %p34
        %s200 = sand.u32 %s50, 1
        %s201 = scalar_lea.sflag [#allocation4], %s200
        %s202 = sand.u32 %s50, 1
        %s203 = smul.addr %s202, 8
        %s204 = scalar_lea.vmem [#allocation3], %s203
        %p205 = pneg %p63
        %p206 = pneg %p60
        %s207 = sand.u32 %s76, 1
        %s208 = scalar_lea.sflag [#allocation6], %s207
        %s209 = sand.u32 %s76, 1
        %s210 = smul.addr %s209, 8
        %s211 = scalar_lea.vmem [#allocation5], %s210
        %p212 = pneg %p89
        %p213 = pneg %p86
        %p214 = pneg %p115
        %p215 = pneg %p112
        %p216 = scmp.lt.s32.totalorder %s21, 1
        %s217 = scalar_select %p216, %s21, 1
        %s218 = smul.addr %s217, 8
        %s219 = scalar_lea.vmem %s3, %s218
        %p220 = scmp.lt.s32.totalorder %s21, 1
        %s221 = scalar_select %p220, %s21, 1
        %s222 = smul.addr %s221, 8
        %s223 = scalar_lea.vmem %s3, %s222
        %v224 = vld [vmem:[%s184] sm:$0xff]
        %v225 = vld [vmem:[%s193] sm:$0xff]
        %s226 = sld [smem:[#allocation2]]
        %vm227 = vcmp.gt.f32.partialorder %v224, 0.0
        %v228 = vsel %vm227, %v224, 1.0
        %v229 = vstv %s226
        %v230 = vlog2.pop %v229
        %v231 = vmul.f32 %v230, 0.6931472
        %v232 = vrcp.pop %v228
        %v233 = vmul.f32 %v225, %v232
        %v234 = vmul.f32 %v231, 2.0
        %v235 = vmul.f32 %v234, %v232
        %v236 = vrsqrt.pop %v235
        %v237 = vmul.f32 %v235, %v236
        %vm238 = vcmp.eq.f32.partialorder %v235, inf
        %v239 = vsel %vm238, %v235, %v237
        %vm240 = vcmp.eq.f32.partialorder %v235, 0.0
        %v241 = vand.u32 %v235, 2147483648
        %v242 = vsel %vm240, %v241, %v239
        %v243 = vadd.f32 %v233, %v242
        %v244 = vsel %vm227, %v243, inf
        %245 = vst [vmem:[%s223] sm:$0xff] %v244
        %p246 = scmp.lt.s32.totalorder %s21, 1
        %s247 = scalar_select %p246, %s21, 1
        %s248 = smul.addr %s247, 8
        %s249 = scalar_lea.vmem %s3, %s248
        // Predicated region
        $region41: #{_ucb_forward.1} parent=31 // pred_check
          %p250 = pneg %p112
        $region42: #{_ucb_forward.1} parent=31 // pred_check_branch
          %252 = sbr.rel (%p250) target = $region44
        $region43: #{_ucb_forward.1} parent=31 // pred_region
          _
        $region44: #{_ucb_forward.1} parent=31 // pred_fallthru
          _
      $region32: #{_ucb_forward.1} parent=5 // pred_fallthru
        _
      %p253 = scmp.le.s32.totalorder 2, %s16
      // Predicated region
      $region45: #{_ucb_forward.1} parent=5 // pred_check
        %p254 = pneg %p253
      $region46: #{_ucb_forward.1} parent=5 // pred_check_branch
        %256 = sbr.rel (%p254) target = $region48
      $region47: #{_ucb_forward.1} parent=5 // pred_region
        %s257 = ssub.s32 %s16, 2
        // Predicated region
        $region49: #{_ucb_forward.1} parent=47 // pred_check
          %p258 = pneg %p118
        $region50: #{_ucb_forward.1} parent=47 // pred_check_branch
          %260 = sbr.rel (%p258) target = $region52
        $region51: #{_ucb_forward.1} parent=47 // pred_region
          %p261 = scmp.lt.s32.totalorder %s22, 1
          %s262 = scalar_select %p261, %s22, 1
          %s263 = smul.addr %s262, 8
          %s264 = scalar_lea.vmem %s3, %s263
        $region52: #{_ucb_forward.1} parent=47 // pred_fallthru
          _
      $region48: #{_ucb_forward.1} parent=5 // pred_fallthru
        _
    $region6: #{_ucb_forward.1} parent=1 // loop_footer
      %s20 = sadd.s32 1, %s16
    $region7: #{_ucb_forward.1} parent=1 // loop_footer_branch
      %15 = sbr.rel target = $region3
    $region8: #{_ucb_forward.1} parent=1 // loop_exit
      _
    %265 = vsyncpa [#allocation4], 1
    %s266 = scalar_lea.sflag [#allocation4], 1
    %267 = vsyncpa %s266, 1
    %268 = vsyncpa [#allocation6], 1
    %s269 = scalar_lea.sflag [#allocation6], 1
    %270 = vsyncpa %s269, 1

</llo_original>
